<compile_context>
chip_gen: v6e
topology: v6e:2x2x1
jax: 0.10.0
libtpu: 0.0.40
codegen_flags: <defaults>
</compile_context>

<pallas_src>
import functools

import jax
import jax.numpy as jnp
from jax.experimental import pallas as pl
from jax.experimental.pallas import tpu as pltpu

_LANE = 128


def _round_up(x, m):
    return ((x + m - 1) // m) * m


def _proj_head_kernel(x_ref, w1_ref, b1_ref, w2_ref, b2_ref, o_ref):
    # x_ref:  (TB, F)         bf16 activation tile
    # w1_ref: (F, H_pad)      bf16, VMEM-resident across the grid
    # b1_ref: (1, H_pad)      f32
    # w2_ref: (H_pad, D_pad)  bf16, VMEM-resident across the grid
    # b2_ref: (1, D_pad)      f32
    # o_ref:  (TB, D_pad)     f32, lane-dense (D_pad multiple of 128)
    x = x_ref[...]
    h = jnp.dot(x, w1_ref[...], preferred_element_type=jnp.float32)
    h = jnp.maximum(h + b1_ref[...], 0.0)            # bias + ReLU in f32 (VPU)
    h = h.astype(w2_ref.dtype)                       # bf16 into second MXU pass
    out = jnp.dot(h, w2_ref[...], preferred_element_type=jnp.float32) + b2_ref[...]
    o_ref[...] = out.astype(o_ref.dtype)


def prepare_proj_head_params(w1, b1, w2, b2, compute_dtype=jnp.bfloat16):
    """One-time weight prep — call OUTSIDE the hot path.

    PyTorch nn.Linear stores W as (out, in); we transpose to (in, out), zero-pad
    hidden/head dims up to lane multiples (128) for lane-dense matmul outputs
    and stores, and cast to bf16 for the MXU. Biases stay f32.
    """
    hidden_dim, feat_dim = w1.shape
    head_dim, _ = w2.shape
    h_pad = _round_up(hidden_dim, _LANE)
    d_pad = _round_up(head_dim, _LANE)

    w1_t = jnp.zeros((feat_dim, h_pad), compute_dtype)
    w1_t = w1_t.at[:, :hidden_dim].set(jnp.transpose(w1).astype(compute_dtype))
    b1_p = jnp.zeros((1, h_pad), jnp.float32)
    b1_p = b1_p.at[:, :hidden_dim].set(b1.astype(jnp.float32)[None, :])
    w2_t = jnp.zeros((h_pad, d_pad), compute_dtype)
    w2_t = w2_t.at[:hidden_dim, :head_dim].set(jnp.transpose(w2).astype(compute_dtype))
    b2_p = jnp.zeros((1, d_pad), jnp.float32)
    b2_p = b2_p.at[:, :head_dim].set(b2.astype(jnp.float32)[None, :])

    return {
        "w1": w1_t, "b1": b1_p, "w2": w2_t, "b2": b2_p,
        "feat_dim": feat_dim, "hidden_dim": hidden_dim, "head_dim": head_dim,
    }


def proj_head(feat, params, *, block_b=256, compute_dtype=jnp.bfloat16):
    """feat: (..., feat_dim); params from prepare_proj_head_params()."""
    feat_dim = params["feat_dim"]
    head_dim = params["head_dim"]
    w1, b1, w2, b2 = params["w1"], params["b1"], params["w2"], params["b2"]
    h_pad = w1.shape[1]
    d_pad = w2.shape[1]

    lead = feat.shape[:-1]
    x2d = feat.reshape(-1, feat_dim).astype(compute_dtype)
    B = x2d.shape[0]

    # Batch tile: multiple of 16 (bf16 sublane packing); conservative 256 cap
    # so the working set fits comfortably in v7x's smaller VMEM as well.
    tb = min(block_b, _round_up(max(B, 1), 16))
    b_pad = _round_up(B, tb)
    if b_pad != B:
        x2d = jnp.pad(x2d, ((0, b_pad - B), (0, 0)))  # ragged tail -> zero rows
    num_tiles = b_pad // tb

    flops = 2 * b_pad * (feat_dim * h_pad + h_pad * d_pad)
    bytes_accessed = (
        x2d.size * x2d.dtype.itemsize
        + w1.size * w1.dtype.itemsize + w2.size * w2.dtype.itemsize
        + b1.size * 4 + b2.size * 4
        + b_pad * d_pad * 4
    )
    cost = pl.CostEstimate(flops=flops, transcendentals=0,
                           bytes_accessed=bytes_accessed)

    out = pl.pallas_call(
        _proj_head_kernel,
        out_shape=jax.ShapeDtypeStruct((b_pad, d_pad), jnp.float32),
        grid=(num_tiles,),
        in_specs=[
            pl.BlockSpec((tb, feat_dim), lambda i: (i, 0)),       # batch-tiled
            pl.BlockSpec((feat_dim, h_pad), lambda i: (0, 0)),    # resident
            pl.BlockSpec((1, h_pad), lambda i: (0, 0)),           # resident
            pl.BlockSpec((h_pad, d_pad), lambda i: (0, 0)),       # resident
            pl.BlockSpec((1, d_pad), lambda i: (0, 0)),           # resident
        ],
        out_specs=pl.BlockSpec((tb, d_pad), lambda i: (i, 0)),
        compiler_params=pltpu.CompilerParams(
            dimension_semantics=("parallel",)),
        cost_estimate=cost,
    )(x2d, w1, b1, w2, b2)

    out = out[:B, :head_dim].astype(feat.dtype)   # drop batch/lane padding
    return out.reshape(*lead, head_dim)


if __name__ == "__main__":
    # Shapes implied by the module: feat is (N, feat_dim); small test sizes.
    feat_dim, hidden_dim, head_dim = 32, 64, 16
    batch = 8

    key = jax.random.PRNGKey(0)
    k_x, k_w1, k_b1, k_w2, k_b2 = jax.random.split(key, 5)

    # Deterministic synthetic parameters (PyTorch nn.Linear-style scaling).
    s1 = 1.0 / jnp.sqrt(feat_dim)
    s2 = 1.0 / jnp.sqrt(hidden_dim)
    w1 = jax.random.uniform(k_w1, (hidden_dim, feat_dim), jnp.float32, -s1, s1)
    b1 = jax.random.uniform(k_b1, (hidden_dim,), jnp.float32, -s1, s1)
    w2 = jax.random.uniform(k_w2, (head_dim, hidden_dim), jnp.float32, -s2, s2)
    b2 = jax.random.uniform(k_b2, (head_dim,), jnp.float32, -s2, s2)

    feat = jax.random.normal(k_x, (batch, feat_dim), jnp.float32)

    # Weight prep once, outside the hot path; hot path jitted with params as
    # closed-over constants (no per-call transpose/pad traffic).
    params = prepare_proj_head_params(w1, b1, w2, b2)
    run = jax.jit(lambda f: proj_head(f, params))

    out = jax.block_until_ready(run(feat))

    # Reference check in plain JAX f32 (same math as the PyTorch module);
    # tolerance accounts for bf16 MXU operands with f32 accumulation.
    ref = jnp.maximum(feat @ w1.T + b1, 0.0) @ w2.T + b2
    assert out.shape == (batch, head_dim)
    assert jnp.allclose(out, ref, atol=2e-2, rtol=2e-2), (
        float(jnp.max(jnp.abs(out - ref))))

    print("KERNEL_OK")
</pallas_src>

<mosaic_0001>
module attributes {stable_mosaic.version = 11 : i64} {
  func.func @_proj_head_kernel(%arg0: i32, %arg1: memref<16x32xbf16, #tpu.memory_space<vmem>>, %arg2: memref<32x128xbf16, #tpu.memory_space<vmem>>, %arg3: memref<1x128xf32, #tpu.memory_space<vmem>>, %arg4: memref<128x128xbf16, #tpu.memory_space<vmem>>, %arg5: memref<1x128xf32, #tpu.memory_space<vmem>>, %arg6: memref<16x128xf32, #tpu.memory_space<vmem>>) attributes {dimension_semantics = [#tpu.dimension_semantics<parallel>], iteration_bounds = array<i64: 1>, scalar_prefetch = 0 : i64, scratch_operands = 0 : i64, tpu.core_type = #tpu.core_type<tc>, window_params = [{transform_indices = @transform_0, window_bounds = array<i64: 16, 32>}, {pipeline_mode = #tpu.pipeline_mode<synchronous>, transform_indices = @transform_1, window_bounds = array<i64: 32, 128>}, {pipeline_mode = #tpu.pipeline_mode<synchronous>, transform_indices = @transform_2, window_bounds = array<i64: 1, 128>}, {pipeline_mode = #tpu.pipeline_mode<synchronous>, transform_indices = @transform_3, window_bounds = array<i64: 128, 128>}, {pipeline_mode = #tpu.pipeline_mode<synchronous>, transform_indices = @transform_4, window_bounds = array<i64: 1, 128>}, {transform_indices = @transform_5, window_bounds = array<i64: 16, 128>}]} {
    %c0 = arith.constant 0 : index
    %c0_0 = arith.constant 0 : index
    %0 = vector.load %arg1[%c0, %c0_0] : memref<16x32xbf16, #tpu.memory_space<vmem>>, vector<16x32xbf16>
    %c0_1 = arith.constant 0 : index
    %c0_2 = arith.constant 0 : index
    %1 = vector.load %arg2[%c0_1, %c0_2] : memref<32x128xbf16, #tpu.memory_space<vmem>>, vector<32x128xbf16>
    %cst = arith.constant dense<0.000000e+00> : vector<16x128xf32>
    %2 = tpu.matmul %0, %1, %cst {dimension_numbers = #tpu.dot_dimension_numbers<[1], [0], [0], [1], [0, 0, 1, 1], [], []>} : vector<16x32xbf16>, vector<32x128xbf16>, vector<16x128xf32> -> vector<16x128xf32>
    %c0_3 = arith.constant 0 : index
    %c0_4 = arith.constant 0 : index
    %3 = vector.load %arg3[%c0_3, %c0_4] : memref<1x128xf32, #tpu.memory_space<vmem>>, vector<1x128xf32>
    %4 = vector.broadcast %3 : vector<1x128xf32> to vector<16x128xf32>
    %5 = arith.addf %2, %4 : vector<16x128xf32>
    %cst_5 = arith.constant 0.000000e+00 : f32
    %6 = vector.broadcast %cst_5 : f32 to vector<16x128xf32>
    %7 = arith.maximumf %5, %6 : vector<16x128xf32>
    %8 = arith.truncf %7 : vector<16x128xf32> to vector<16x128xbf16>
    %c0_6 = arith.constant 0 : index
    %c0_7 = arith.constant 0 : index
    %9 = vector.load %arg4[%c0_6, %c0_7] : memref<128x128xbf16, #tpu.memory_space<vmem>>, vector<128x128xbf16>
    %cst_8 = arith.constant dense<0.000000e+00> : vector<16x128xf32>
    %10 = tpu.matmul %8, %9, %cst_8 {dimension_numbers = #tpu.dot_dimension_numbers<[1], [0], [0], [1], [0, 0, 1, 1], [], []>} : vector<16x128xbf16>, vector<128x128xbf16>, vector<16x128xf32> -> vector<16x128xf32>
    %c0_9 = arith.constant 0 : index
    %c0_10 = arith.constant 0 : index
    %11 = vector.load %arg5[%c0_9, %c0_10] : memref<1x128xf32, #tpu.memory_space<vmem>>, vector<1x128xf32>
    %12 = vector.broadcast %11 : vector<1x128xf32> to vector<16x128xf32>
    %13 = arith.addf %10, %12 : vector<16x128xf32>
    %c0_11 = arith.constant 0 : index
    %c0_12 = arith.constant 0 : index
    %14 = vector.load %arg6[%c0_11, %c0_12] : memref<16x128xf32, #tpu.memory_space<vmem>>, vector<16x128xf32>
    tpu.vector_store %arg6[%c0_11, %c0_12], %13 {strides = array<i32>} : memref<16x128xf32, #tpu.memory_space<vmem>>, vector<16x128xf32>,
    return
  }
  func.func @transform_0(%arg0: i32) -> (i32, i32) {
    %c0_i32 = arith.constant 0 : i32
    %c0_i32_0 = arith.constant 0 : i32
    return %arg0, %c0_i32 : i32, i32
  }
  func.func @transform_1(%arg0: i32) -> (i32, i32) {
    %c0_i32 = arith.constant 0 : i32
    %c0_i32_0 = arith.constant 0 : i32
    %c0_i32_1 = arith.constant 0 : i32
    return %c0_i32, %c0_i32_0 : i32, i32
  }
  func.func @transform_2(%arg0: i32) -> (i32, i32) {
    %c0_i32 = arith.constant 0 : i32
    %c0_i32_0 = arith.constant 0 : i32
    %c0_i32_1 = arith.constant 0 : i32
    return %c0_i32, %c0_i32_0 : i32, i32
  }
  func.func @transform_3(%arg0: i32) -> (i32, i32) {
    %c0_i32 = arith.constant 0 : i32
    %c0_i32_0 = arith.constant 0 : i32
    %c0_i32_1 = arith.constant 0 : i32
    return %c0_i32, %c0_i32_0 : i32, i32
  }
  func.func @transform_4(%arg0: i32) -> (i32, i32) {
    %c0_i32 = arith.constant 0 : i32
    %c0_i32_0 = arith.constant 0 : i32
    %c0_i32_1 = arith.constant 0 : i32
    return %c0_i32, %c0_i32_0 : i32, i32
  }
  func.func @transform_5(%arg0: i32) -> (i32, i32) {
    %c0_i32 = arith.constant 0 : i32
    %c0_i32_0 = arith.constant 0 : i32
    return %arg0, %c0_i32 : i32, i32
  }
}

</mosaic_0001>

<llo_original>
// kernel: _lambda_.1
$region0: #{_lambda_.1}
  #allocation0 [shape = 'u32[]', space=smem, size = 0x4, offset = 0x4, fixed_abs, tag = 'smem constant byte address 0x4 - core index']
  #allocation1 [shape = 'u32[144,128]{1,0:T(1,128)}', space=vmem, size = 0x12000, scoped, tag = 'internal scratch']
  %s0 = inlined_call_operand.vmem [shape: bf16[16,32], index: 0, kind: input, shape index: {}]
  %s1 = inlined_call_operand.vmem [shape: bf16[32,128], index: 1, kind: input, shape index: {}]
  %s2 = inlined_call_operand.vmem [shape: f32[1,128], index: 2, kind: input, shape index: {}]
  %s3 = inlined_call_operand.hbm [shape: bf16[128,128], index: 3, kind: input, shape index: {}]
  %s4 = inlined_call_operand.vmem [shape: f32[1,128], index: 4, kind: input, shape index: {}]
  %s5 = inlined_call_operand.vmem [shape: f32[16,128], index: 5, kind: output, shape index: {}]
  %s6 = sld [smem:[#allocation0]]
  $region34: #{_lambda_.1} parent=0
    _
  %s8 = ssub.s32 1, %s6
  %s9 = scalar_select 0, %s8, %s6
  $region1: #{_lambda_.1} parent=0
    #allocation2 [shape = 'u8[32768]{0}', space=vmem, size = 0x8000, scoped, tag = 'input window, operand 3, single buffered']
    #allocation3 [shape = 's32[1]{0}', space=sflag, size = 0x4, scoped, tag = 'scoped memory for _lambda_.1']
    %10 = vsyncpa [#allocation3], 0
    // Predicated region
    $region2: #{_lambda_.1} parent=1 // pred_check
      _
    $region3: #{_lambda_.1} parent=1 // pred_check_branch
      %12 = sbr.rel (0) target = $region5
    $region4: #{_lambda_.1} parent=1 // pred_region
      _
    $region5: #{_lambda_.1} parent=1 // pred_fallthru
      _
    // Predicated region
    $region6: #{_lambda_.1} parent=1 // pred_check
      _
    $region7: #{_lambda_.1} parent=1 // pred_check_branch
      %14 = sbr.rel (0) target = $region9
    $region8: #{_lambda_.1} parent=1 // pred_region
      _
    $region9: #{_lambda_.1} parent=1 // pred_fallthru
      _
    // Predicated region
    $region10: #{_lambda_.1} parent=1 // pred_check
      _
    $region11: #{_lambda_.1} parent=1 // pred_check_branch
      %16 = sbr.rel (0) target = $region13
    $region12: #{_lambda_.1} parent=1 // pred_region
      _
    $region13: #{_lambda_.1} parent=1 // pred_fallthru
      _
    // Predicated region
    $region14: #{_lambda_.1} parent=1 // pred_check
      _
    $region15: #{_lambda_.1} parent=1 // pred_check_branch
      %18 = sbr.rel (0) target = $region17
    $region16: #{_lambda_.1} parent=1 // pred_region
      %s20 = ssub.s32 1024, 1024
      %21 = vsyncadd [#allocation3], %s20
      %s22 = sshll.u32 [#allocation2], 4
      %s23 = int_to_ptr.vmem [resolvable:$true] %s22
      %28 = dma.hbm_to_vmem [thread:$0]  %s3, 1024, %s23, [#allocation3], 64, 64, 4
    $region17: #{_lambda_.1} parent=1 // pred_fallthru
      _
    // Predicated region
    $region18: #{_lambda_.1} parent=1 // pred_check
      _
    $region19: #{_lambda_.1} parent=1 // pred_check_branch
      %30 = sbr.rel (0) target = $region21
    $region20: #{_lambda_.1} parent=1 // pred_region
      _
    $region21: #{_lambda_.1} parent=1 // pred_fallthru
      _
    // Predicated region
    $region22: #{_lambda_.1} parent=1 // pred_check
      _
    $region23: #{_lambda_.1} parent=1 // pred_check_branch
      %32 = sbr.rel (0) target = $region25
    $region24: #{_lambda_.1} parent=1 // pred_region
      %33 = dma.done [#allocation3], 1024
    $region25: #{_lambda_.1} parent=1 // pred_fallthru
      _
    %v35 = vld [vmem:[%s0] sm:$0xf]
    %v36 = vld [vmem:[%s0 + $0x4] sm:$0xf]
    %v37 = vld [vmem:[%s1] sm:$0xf]
    %v38 = vld [vmem:[%s1 + $0x4] sm:$0xf]
    %v39 = vld [vmem:[%s1 + $0x8] sm:$0xf]
    %v40 = vld [vmem:[%s1 + $0xc] sm:$0xf]
    %v41 = vld [vmem:[%s2] sm:$0x1]
    %v43 = vlaneseq
    %v44 = vshrl.u32 %v43, 7
    %v45 = vsub.s32 0, %v44
    %v46 = vrot.slane %v41, %v45
    %v50 = vunpack.c.l.b16 %v35
    %v51 = vunpack.c.l.b16 %v36
    %v52 = vpack.c.b16 %v51, %v50
    %v57 = vunpack.c.l.b16 %v37
    %v58 = vunpack.c.l.b16 %v38
    %v59 = vunpack.c.l.b16 %v39
    %v60 = vunpack.c.l.b16 %v40
    %v61 = vpack.c.b16 %v58, %v57
    %v62 = vpack.c.b16 %v60, %v59
    %vm65 = vcmask 261120
    %v67 = vsel %vm65, %v52, 0
    %69 = vmatprep.subr.bf16.mxu0 0
    %70 = vmatpush1.bf16.msra.mxu0 0
    %71 = vmatprep.subr.bf16.mxu0 0
    %72 = vmatpush1.bf16.msra.mxu0 0
    %73 = vmatprep.subr.bf16.mxu0 0
    %74 = vmatpush1.bf16.msra.mxu0 0
    %75 = vmatprep.subr.bf16.mxu0 0
    %76 = vmatpush1.bf16.msra.mxu0 0
    %77 = vmatprep.subr.bf16.mxu0 0
    %78 = vmatpush1.bf16.msra.mxu0 0
    %79 = vmatprep.subr.bf16.mxu0 0
    %80 = vmatpush1.bf16.msra.mxu0 0
    %81 = vmatprep.subr.bf16.mxu0 0
    %82 = vmatpush1.bf16.msra.mxu0 %v62
    %83 = vmatprep.subr.bf16.mxu0 0
    %84 = vmatpush1.bf16.msra.mxu0 %v61
    %85 = vmatprep.subr.bf16.mxu0 0
    %86 = vmatpush2.bf16.msra.mxu0 0
    %87 = vmatprep.subr.bf16.mxu0 0
    %88 = vmatpush2.bf16.msra.mxu0 0
    %89 = vmatprep.subr.bf16.mxu0 0
    %90 = vmatpush2.bf16.msra.mxu0 0
    %91 = vmatprep.subr.bf16.mxu0 0
    %92 = vmatpush2.bf16.msra.mxu0 0
    %93 = vmatprep.subr.bf16.mxu0 0
    %94 = vmatpush2.bf16.msra.mxu0 0
    %95 = vmatprep.subr.bf16.mxu0 0
    %96 = vmatpush2.bf16.msra.mxu0 0
    %97 = vmatprep.subr.bf16.mxu0 0
    %98 = vmatpush2.bf16.msra.mxu0 0
    %99 = vmatprep.subr.bf16.mxu0 0
    %100 = vmatpush2.bf16.msra.mxu0 0
    %101 = vmatprep.mubr.bf16.mxu0 0
    %102 = vmatmul.mubr.bf16.gmra.mxu0 %v67
    %v103 = vpop.f32.mrf.mxu0
    %v104 = vadd.f32 %v46, %v103
    %v105 = vpop.f32.mrf.mxu0
    %v106 = vpop.f32.mrf.mxu0
    %v107 = vadd.f32 %v46, %v106
    %v108 = vpop.f32.mrf.mxu0
    %109 = vdwg.mxu0
    %v110 = vmax.f32 %v104, 0.0
    %v111 = vmax.f32 %v107, 0.0
    %v112 = vpack.c.bf16 %v111, %v110
    %v113 = vld [vmem:[#allocation2] sm:$0xf]
    %v114 = vld [vmem:[#allocation2 + $0x4] sm:$0xf]
    %v115 = vld [vmem:[#allocation2 + $0x8] sm:$0xf]
    %v116 = vld [vmem:[#allocation2 + $0xc] sm:$0xf]
    %v117 = vld [vmem:[#allocation2 + $0x10] sm:$0xf]
    %v118 = vld [vmem:[#allocation2 + $0x14] sm:$0xf]
    %v119 = vld [vmem:[#allocation2 + $0x18] sm:$0xf]
    %v120 = vld [vmem:[#allocation2 + $0x1c] sm:$0xf]
    %v121 = vld [vmem:[#allocation2 + $0x20] sm:$0xf]
    %v122 = vld [vmem:[#allocation2 + $0x24] sm:$0xf]
    %v123 = vld [vmem:[#allocation2 + $0x28] sm:$0xf]
    %v124 = vld [vmem:[#allocation2 + $0x2c] sm:$0xf]
    %v125 = vld [vmem:[#allocation2 + $0x30] sm:$0xf]
    %v126 = vld [vmem:[#allocation2 + $0x34] sm:$0xf]
    %v127 = vld [vmem:[#allocation2 + $0x38] sm:$0xf]
    %v128 = vld [vmem:[#allocation2 + $0x3c] sm:$0xf]
    %v129 = vld [vmem:[%s4] sm:$0x1]
    %v131 = vlaneseq
    %v132 = vshrl.u32 %v131, 7
    %v133 = vsub.s32 0, %v132
    %v134 = vrot.slane %v129, %v133
    %v152 = vunpack.c.l.b16 %v113
    %v153 = vunpack.c.l.b16 %v114
    %v154 = vunpack.c.l.b16 %v115
    %v155 = vunpack.c.l.b16 %v116
    %v156 = vunpack.c.l.b16 %v117
    %v157 = vunpack.c.l.b16 %v118
    %v158 = vunpack.c.l.b16 %v119
    %v159 = vunpack.c.l.b16 %v120
    %v160 = vunpack.c.l.b16 %v121
    %v161 = vunpack.c.l.b16 %v122
    %v162 = vunpack.c.l.b16 %v123
    %v163 = vunpack.c.l.b16 %v124
    %v164 = vunpack.c.l.b16 %v125
    %v165 = vunpack.c.l.b16 %v126
    %v166 = vunpack.c.l.b16 %v127
    %v167 = vunpack.c.l.b16 %v128
    %v168 = vpack.c.b16 %v153, %v152
    %v169 = vpack.c.b16 %v155, %v154
    %v170 = vpack.c.b16 %v157, %v156
    %v171 = vpack.c.b16 %v159, %v158
    %v172 = vpack.c.b16 %v161, %v160
    %v173 = vpack.c.b16 %v163, %v162
    %v174 = vpack.c.b16 %v165, %v164
    %v175 = vpack.c.b16 %v167, %v166
    %184 = vmatprep.subr.bf16.mxu0 0
    %185 = vmatpush1.bf16.msra.mxu0 %v175
    %186 = vmatprep.subr.bf16.mxu0 0
    %187 = vmatpush1.bf16.msra.mxu0 %v174
    %188 = vmatprep.subr.bf16.mxu0 0
    %189 = vmatpush1.bf16.msra.mxu0 %v173
    %190 = vmatprep.subr.bf16.mxu0 0
    %191 = vmatpush1.bf16.msra.mxu0 %v172
    %192 = vmatprep.subr.bf16.mxu0 0
    %193 = vmatpush1.bf16.msra.mxu0 %v171
    %194 = vmatprep.subr.bf16.mxu0 0
    %195 = vmatpush1.bf16.msra.mxu0 %v170
    %196 = vmatprep.subr.bf16.mxu0 0
    %197 = vmatpush1.bf16.msra.mxu0 %v169
    %198 = vmatprep.subr.bf16.mxu0 0
    %199 = vmatpush1.bf16.msra.mxu0 %v168
    %200 = vmatprep.subr.bf16.mxu0 0
    %201 = vmatpush2.bf16.msra.mxu0 0
    %202 = vmatprep.subr.bf16.mxu0 0
    %203 = vmatpush2.bf16.msra.mxu0 0
    %204 = vmatprep.subr.bf16.mxu0 0
    %205 = vmatpush2.bf16.msra.mxu0 0
    %206 = vmatprep.subr.bf16.mxu0 0
    %207 = vmatpush2.bf16.msra.mxu0 0
    %208 = vmatprep.subr.bf16.mxu0 0
    %209 = vmatpush2.bf16.msra.mxu0 0
    %210 = vmatprep.subr.bf16.mxu0 0
    %211 = vmatpush2.bf16.msra.mxu0 0
    %212 = vmatprep.subr.bf16.mxu0 0
    %213 = vmatpush2.bf16.msra.mxu0 0
    %214 = vmatprep.subr.bf16.mxu0 0
    %215 = vmatpush2.bf16.msra.mxu0 0
    %216 = vmatprep.mubr.bf16.mxu0 0
    %217 = vmatmul.mubr.bf16.gmra.mxu0 %v112
    %v218 = vpop.f32.mrf.mxu0
    %v219 = vadd.f32 %v134, %v218
    %v220 = vpop.f32.mrf.mxu0
    %v221 = vpop.f32.mrf.mxu0
    %v222 = vadd.f32 %v134, %v221
    %v223 = vpop.f32.mrf.mxu0
    %224 = vdwg.mxu0
    %225 = vst [vmem:[%s5] sm:$0xff] %v219
    %226 = vst [vmem:[%s5 + $0x8] sm:$0xff] %v222
    // Predicated region
    $region26: #{_lambda_.1} parent=1 // pred_check
      _
    $region27: #{_lambda_.1} parent=1 // pred_check_branch
      %228 = sbr.rel (0) target = $region29
    $region28: #{_lambda_.1} parent=1 // pred_region
      _
    $region29: #{_lambda_.1} parent=1 // pred_fallthru
      _
    // Predicated region
    $region30: #{_lambda_.1} parent=1 // pred_check
      _
    $region31: #{_lambda_.1} parent=1 // pred_check_branch
      %230 = sbr.rel (0) target = $region33
    $region32: #{_lambda_.1} parent=1 // pred_region
      _
    $region33: #{_lambda_.1} parent=1 // pred_fallthru
      _
    %231 = vsyncpa [#allocation3], 1

</llo_original>
